<compile_context>
chip_gen: v7x
topology: tpu7x:2x2x1
jax: 0.10.0
libtpu: 0.0.40
codegen_flags: <defaults>
</compile_context>

<pallas_src>
import functools

import jax
import jax.numpy as jnp
import numpy as np
from jax.experimental import pallas as pl
from jax.experimental.pallas import tpu as pltpu


def _round_up(x, m):
    return (x + m - 1) // m * m


def _pad_gate_blocks(w, h, h_pad):
    """Pad the trailing 4*h gate axis (layout i|f|g|o) to 4*h_pad, per block."""
    if h_pad == h:
        return w
    lead = w.shape[:-1]
    w4 = w.reshape(lead + (4, h))
    w4 = jnp.pad(w4, [(0, 0)] * len(lead) + [(0, 0), (0, h_pad - h)])
    return w4.reshape(lead + (4 * h_pad,))


# ---------------------------------------------------------------------------
# Time-parallel matmul + bias (used for x@W_ih + b and h@W_fc + b_fc)
# ---------------------------------------------------------------------------
def _matmul_bias_kernel(a_ref, b_ref, bias_ref, o_ref):
    o_ref[...] = (
        jnp.dot(a_ref[...], b_ref[...], preferred_element_type=jnp.float32)
        + bias_ref[...].astype(jnp.float32)
    ).astype(o_ref.dtype)


def matmul_bias(a, b, bias, out_dtype=jnp.float32, tm_max=256, tn_max=512):
    """out = a @ b + bias, tiled over (M, N) with full-K blocks. bias: (1, N).

    The weight (N) tile index lives on the OUTER grid axis, so the (K, tn)
    weight slab is fetched from HBM exactly once; only the small (tm, K)
    activation tile is re-streamed on the inner axis.  tm is 256-friendly for
    the 2x256^2 MXUs on v6e/v7x (M here is T*B, always a multiple of 8).
    """
    M, K = a.shape
    Kb, N = b.shape
    assert K == Kb
    tm = min(tm_max, M)
    tn = min(tn_max, N)
    M_pad = _round_up(M, tm)
    N_pad = _round_up(N, tn)
    if M_pad != M:
        a = jnp.pad(a, ((0, M_pad - M), (0, 0)))
    if N_pad != N:
        b = jnp.pad(b, ((0, 0), (0, N_pad - N)))
        bias = jnp.pad(bias, ((0, 0), (0, N_pad - N)))

    out = pl.pallas_call(
        _matmul_bias_kernel,
        out_shape=jax.ShapeDtypeStruct((M_pad, N_pad), out_dtype),
        grid_spec=pltpu.PrefetchScalarGridSpec(
            num_scalar_prefetch=0,
            grid=(N_pad // tn, M_pad // tm),          # weight tile outer
            in_specs=[
                pl.BlockSpec((tm, K), lambda j, i: (i, 0)),
                pl.BlockSpec((K, tn), lambda j, i: (0, j)),
                pl.BlockSpec((1, tn), lambda j, i: (0, j)),
            ],
            out_specs=pl.BlockSpec((tm, tn), lambda j, i: (i, j)),
        ),
        compiler_params=pltpu.CompilerParams(
            dimension_semantics=("parallel", "parallel"),
            vmem_limit_bytes=48 * 1024 * 1024),
    )(a, b, bias)
    return out[:M, :N]


# ---------------------------------------------------------------------------
# Sequential recurrence: only h_prev @ W_hh + elementwise gates in the loop.
# One grid step processes a block of t_block timesteps via an in-kernel loop.
# ---------------------------------------------------------------------------
def _lstm_recurrent_kernel(gx_ref, whh_ref, h_out_ref, h_state, c_state,
                           *, unroll):
    """gx_ref: (Tt, B, 4H) precomputed x@W_ih + b; whh_ref: (H, 4H);
    h_out_ref: (Tt, B, H); h_state/c_state: (B, H) fp32 scratch carried
    across grid steps (grid axis is 'arbitrary' / sequential)."""
    H = h_state.shape[-1]

    @pl.when(pl.program_id(0) == 0)
    def _():
        h_state[...] = jnp.zeros_like(h_state)
        c_state[...] = jnp.zeros_like(c_state)

    # Hoist the full W_hh read out of the serial loop: one VMEM->vreg load of
    # the (H_pad, 4*H_pad) weight per t-block instead of per timestep.
    # TODO(synk): explicit pltpu.matmul_push_rhs/matmul_acc_lhs/matmul_pop would
    # additionally keep W_hh latched in the MXU across timesteps.
    w = whh_ref[...]

    def step(t, carry):
        h, c = carry
        gates = gx_ref[t].astype(jnp.float32) + jnp.dot(
            h.astype(w.dtype), w, preferred_element_type=jnp.float32)  # (B,4H)
        # gate order i, f, g, o; H is a multiple of 128 -> lane-aligned slices
        i_g = jax.nn.sigmoid(gates[:, 0:H])
        f_g = jax.nn.sigmoid(gates[:, H:2 * H])
        g_g = jnp.tanh(gates[:, 2 * H:3 * H])
        o_g = jax.nn.sigmoid(gates[:, 3 * H:4 * H])
        c = f_g * c + i_g * g_g
        h = o_g * jnp.tanh(c)
        h_out_ref[t] = h.astype(h_out_ref.dtype)
        return (h, c)

    # Partial unroll: overlaps step t's gate math / store with step t+1's loads.
    h, c = jax.lax.fori_loop(0, gx_ref.shape[0], step,
                             (h_state[...], c_state[...]), unroll=unroll)
    h_state[...] = h
    c_state[...] = c


def lstm_recurrent(gates_x, w_hh, h_dtype, t_block, unroll=2):
    T_pad, B_pad, G = gates_x.shape
    H_pad = w_hh.shape[0]
    kernel = functools.partial(_lstm_recurrent_kernel, unroll=unroll)
    return pl.pallas_call(
        kernel,
        out_shape=jax.ShapeDtypeStruct((T_pad, B_pad, H_pad), h_dtype),
        grid_spec=pltpu.PrefetchScalarGridSpec(
            num_scalar_prefetch=0,
            grid=(T_pad // t_block,),
            in_specs=[
                pl.BlockSpec((t_block, B_pad, G), lambda s: (s, 0, 0)),
                pl.BlockSpec((H_pad, G), lambda s: (0, 0)),   # constant weight
            ],
            out_specs=pl.BlockSpec((t_block, B_pad, H_pad), lambda s: (s, 0, 0)),
            scratch_shapes=[pltpu.VMEM((B_pad, H_pad), jnp.float32),   # h state
                            pltpu.VMEM((B_pad, H_pad), jnp.float32)],  # c state
        ),
        compiler_params=pltpu.CompilerParams(
            dimension_semantics=("arbitrary",),               # recurrence
            vmem_limit_bytes=48 * 1024 * 1024),
    )(gates_x, w_hh)


def _pick_t_block(T, B_pad, H_pad, gx_itemsize, h_itemsize, w_itemsize,
                  budget_bytes=24 * 1024 * 1024, t_cap=256):
    """VMEM-budget-aware t_block (double-buffered gx + h_out blocks, W_hh,
    h/c scratch), then cdiv-based so T padding adds < n_blocks dead steps."""
    per_t = (2 * B_pad * 4 * H_pad * gx_itemsize      # gx block, double-buffered
             + 2 * B_pad * H_pad * h_itemsize)        # h_out block, double-buffered
    fixed = (2 * H_pad * 4 * H_pad * w_itemsize       # W_hh (double-buffered)
             + 2 * B_pad * H_pad * 4)                 # h/c fp32 scratch
    t_max = int(max(1, min(t_cap, (budget_bytes - fixed) // per_t)))
    n_blocks = pl.cdiv(T, t_max)
    t_block = pl.cdiv(T, n_blocks)
    return t_block, t_block * n_blocks


# ---------------------------------------------------------------------------
# Full forward
# ---------------------------------------------------------------------------
def decoder_forward_pallas(features, captions, params,
                           *, compute_dtype=jnp.float32):
    W_emb, W_ih, W_hh, b_lstm, W_fc, b_fc = params
    E = W_emb.shape[1]
    H = W_hh.shape[0]
    V = W_fc.shape[1]
    B = features.shape[0]

    # --- glue (plain JAX): embedding lookup + features as timestep 0 ---
    captions = captions[:, :-1]
    emb = jnp.take(W_emb, captions, axis=0)                         # (B, T-1, E)
    lstm_in = jnp.concatenate([features[:, None, :], emb], axis=1)  # (B, T, E)
    x = jnp.transpose(lstm_in, (1, 0, 2)).astype(jnp.float32)       # (T, B, E)
    T = x.shape[0]

    cd = jnp.dtype(compute_dtype)
    use_bf16 = cd == jnp.dtype(jnp.bfloat16)

    # --- padding for lane/sublane alignment (cropped at the end) ---
    # bf16 packs 2 rows per sublane: pad B to 16 when the real batch is >= 8
    # so gate vregs / h stores are fully packed (skip for tiny B).
    b_mult = 16 if (use_bf16 and B >= 8) else 8
    B_pad = _round_up(B, b_mult)
    E_pad = _round_up(E, 128)
    H_pad = _round_up(H, 128)
    V_pad = _round_up(V, 128)

    # gates_x (largest intermediate) is emitted in the compute dtype: halves
    # its HBM round trip and its VMEM block in the bf16 path.
    gx_dtype = cd
    itemsize = cd.itemsize
    t_block, T_pad = _pick_t_block(
        T, B_pad, H_pad,
        gx_itemsize=jnp.dtype(gx_dtype).itemsize,
        h_itemsize=itemsize, w_itemsize=itemsize)

    # Zero-pad params so padded hidden lanes stay exactly 0 through the LSTM.
    W_ih_p = _pad_gate_blocks(jnp.pad(W_ih, ((0, E_pad - E), (0, 0))), H, H_pad)
    W_hh_p = _pad_gate_blocks(jnp.pad(W_hh, ((0, H_pad - H), (0, 0))), H, H_pad)
    b_p = _pad_gate_blocks(b_lstm, H, H_pad).astype(jnp.float32)    # (1, 4*H_pad)
    W_fc_p = jnp.pad(W_fc, ((0, H_pad - H), (0, V_pad - V)))
    b_fc_p = jnp.pad(b_fc, ((0, 0), (0, V_pad - V))).astype(jnp.float32)

    x_p = jnp.pad(x, ((0, T_pad - T), (0, B_pad - B), (0, E_pad - E)))

    # bf16 weights/activations feed the MXU (bf16-native on v5e/v6e/v7x);
    # gate math, h/c state and matmul accumulation stay fp32.
    x_p = x_p.astype(cd)
    W_ih_p = W_ih_p.astype(cd)
    W_hh_p = W_hh_p.astype(cd)
    W_fc_p = W_fc_p.astype(cd)

    # (1) time-parallel input projection (hoisted out of the recurrence)
    gx2d = matmul_bias(x_p.reshape(T_pad * B_pad, E_pad), W_ih_p, b_p,
                       out_dtype=gx_dtype)
    gates_x = gx2d.reshape(T_pad, B_pad, 4 * H_pad)

    # (2) sequential recurrence: h @ W_hh + gates only
    h_all = lstm_recurrent(gates_x, W_hh_p, h_dtype=cd, t_block=t_block,
                           unroll=2)

    # (3) time-parallel FC projection
    logits2d = matmul_bias(h_all.reshape(T_pad * B_pad, H_pad), W_fc_p, b_fc_p,
                           out_dtype=jnp.float32)
    logits = logits2d.reshape(T_pad, B_pad, V_pad)[:T, :B, :V]
    return jnp.transpose(logits, (1, 0, 2))                        # (B, T, V)


# ---------------------------------------------------------------------------
# Pure-JAX reference (lax.scan LSTM) for correctness checking
# ---------------------------------------------------------------------------
def decoder_forward_ref(features, captions, params):
    W_emb, W_ih, W_hh, b_lstm, W_fc, b_fc = params
    captions = captions[:, :-1]
    emb = W_emb[captions]
    lstm_in = jnp.concatenate([features[:, None, :], emb], axis=1)  # (B,T,E)
    x = jnp.transpose(lstm_in, (1, 0, 2))                           # (T,B,E)
    B = x.shape[1]
    H = W_hh.shape[0]

    def step(carry, xt):
        h, c = carry
        gates = xt @ W_ih + h @ W_hh + b_lstm[0]
        i = jax.nn.sigmoid(gates[:, 0:H])
        f = jax.nn.sigmoid(gates[:, H:2 * H])
        g = jnp.tanh(gates[:, 2 * H:3 * H])
        o = jax.nn.sigmoid(gates[:, 3 * H:4 * H])
        c = f * c + i * g
        h = o * jnp.tanh(c)
        return (h, c), h

    h0 = jnp.zeros((B, H), jnp.float32)
    _, hs = jax.lax.scan(step, (h0, h0), x)                          # (T,B,H)
    logits = hs @ W_fc + b_fc[0]                                     # (T,B,V)
    return jnp.transpose(logits, (1, 0, 2))


def init_params(key, embed_size, hidden_size, vocab_size):
    ks = jax.random.split(key, 6)
    scale = 0.1
    W_emb = scale * jax.random.normal(ks[0], (vocab_size, embed_size), jnp.float32)
    W_ih = scale * jax.random.normal(ks[1], (embed_size, 4 * hidden_size), jnp.float32)
    W_hh = scale * jax.random.normal(ks[2], (hidden_size, 4 * hidden_size), jnp.float32)
    b_lstm = scale * jax.random.normal(ks[3], (1, 4 * hidden_size), jnp.float32)
    W_fc = scale * jax.random.normal(ks[4], (hidden_size, vocab_size), jnp.float32)
    b_fc = scale * jax.random.normal(ks[5], (1, vocab_size), jnp.float32)
    return (W_emb, W_ih, W_hh, b_lstm, W_fc, b_fc)


if __name__ == "__main__":
    embed_size = 32
    hidden_size = 32
    vocab_size = 64
    batch = 2
    caption_len = 9   # forward drops last token -> 8 embedded steps + 1 feature step = T=9

    key = jax.random.PRNGKey(0)
    k_feat, k_cap, k_par = jax.random.split(key, 3)

    features = jax.random.normal(k_feat, (batch, embed_size), jnp.float32)
    captions = jax.random.randint(k_cap, (batch, caption_len), 0, vocab_size, jnp.int32)
    params = init_params(k_par, embed_size, hidden_size, vocab_size)

    ref = decoder_forward_ref(features, captions, params)

    # fp32 path (tight check, works on all generations)
    out = decoder_forward_pallas(features, captions, params,
                                 compute_dtype=jnp.float32)
    out = jax.block_until_ready(out)
    assert out.shape == (batch, caption_len, vocab_size)
    np.testing.assert_allclose(np.asarray(out), np.asarray(ref),
                               rtol=1e-5, atol=1e-5)

    # bf16 weights/activations + bf16 gates_x intermediate; gate math / state fp32.
    out_bf16 = decoder_forward_pallas(features, captions, params,
                                      compute_dtype=jnp.bfloat16)
    out_bf16 = jax.block_until_ready(out_bf16)
    np.testing.assert_allclose(np.asarray(out_bf16), np.asarray(ref),
                               rtol=5e-2, atol=5e-2)

    print("KERNEL_OK")
</pallas_src>

<mosaic_0001>
module attributes {stable_mosaic.version = 11 : i64} {
  func.func @_matmul_bias_kernel(%arg0: i32, %arg1: i32, %arg2: memref<72x128xf32, #tpu.memory_space<vmem>>, %arg3: memref<128x512xf32, #tpu.memory_space<vmem>>, %arg4: memref<1x512xf32, #tpu.memory_space<vmem>>, %arg5: memref<72x512xf32, #tpu.memory_space<vmem>>) attributes {dimension_semantics = [#tpu.dimension_semantics<parallel>, #tpu.dimension_semantics<parallel>], iteration_bounds = array<i64: 1, 1>, scalar_prefetch = 0 : i64, scratch_operands = 0 : i64, tpu.core_type = #tpu.core_type<tc>, window_params = [{transform_indices = @transform_0, window_bounds = array<i64: 72, 128>}, {transform_indices = @transform_1, window_bounds = array<i64: 128, 512>}, {transform_indices = @transform_2, window_bounds = array<i64: 1, 512>}, {transform_indices = @transform_3, window_bounds = array<i64: 72, 512>}]} {
    %c0 = arith.constant 0 : index
    %c0_0 = arith.constant 0 : index
    %0 = vector.load %arg2[%c0, %c0_0] : memref<72x128xf32, #tpu.memory_space<vmem>>, vector<72x128xf32>
    %c0_1 = arith.constant 0 : index
    %c0_2 = arith.constant 0 : index
    %1 = vector.load %arg3[%c0_1, %c0_2] : memref<128x512xf32, #tpu.memory_space<vmem>>, vector<128x512xf32>
    %cst = arith.constant dense<0.000000e+00> : vector<72x512xf32>
    %2 = tpu.matmul %0, %1, %cst {dimension_numbers = #tpu.dot_dimension_numbers<[1], [0], [0], [1], [0, 0, 1, 1], [], []>} : vector<72x128xf32>, vector<128x512xf32>, vector<72x512xf32> -> vector<72x512xf32>
    %c0_3 = arith.constant 0 : index
    %c0_4 = arith.constant 0 : index
    %3 = vector.load %arg4[%c0_3, %c0_4] : memref<1x512xf32, #tpu.memory_space<vmem>>, vector<1x512xf32>
    %4 = vector.broadcast %3 : vector<1x512xf32> to vector<72x512xf32>
    %5 = arith.addf %2, %4 : vector<72x512xf32>
    %c0_5 = arith.constant 0 : index
    %c0_6 = arith.constant 0 : index
    %6 = vector.load %arg5[%c0_5, %c0_6] : memref<72x512xf32, #tpu.memory_space<vmem>>, vector<72x512xf32>
    tpu.vector_store %arg5[%c0_5, %c0_6], %5 {strides = array<i32>} : memref<72x512xf32, #tpu.memory_space<vmem>>, vector<72x512xf32>,
    return
  }
  func.func @transform_0(%arg0: i32, %arg1: i32) -> (i32, i32) {
    %c0_i32 = arith.constant 0 : i32
    %c0_i32_0 = arith.constant 0 : i32
    return %arg1, %c0_i32 : i32, i32
  }
  func.func @transform_1(%arg0: i32, %arg1: i32) -> (i32, i32) {
    %c0_i32 = arith.constant 0 : i32
    %c0_i32_0 = arith.constant 0 : i32
    return %c0_i32, %arg0 : i32, i32
  }
  func.func @transform_2(%arg0: i32, %arg1: i32) -> (i32, i32) {
    %c0_i32 = arith.constant 0 : i32
    %c0_i32_0 = arith.constant 0 : i32
    return %c0_i32, %arg0 : i32, i32
  }
  func.func @transform_3(%arg0: i32, %arg1: i32) -> (i32, i32) {
    %c0_i32 = arith.constant 0 : i32
    return %arg1, %arg0 : i32, i32
  }
}

</mosaic_0001>

<llo_original>
// kernel: tpu_custom_call.1
$region0: #{tpu_custom_call.1}
  #allocation0 [shape = 'u32[]', space=smem, size = 0x4, offset = 0x4, fixed_abs, tag = 'smem constant byte address 0x4 - core index']
  #allocation1 [shape = 'u32[144,128]{1,0:T(1,128)}', space=vmem, size = 0x12000, scoped, tag = 'internal scratch']
  %s0 = inlined_call_operand.hbm [shape: f32[72,128], index: 0, kind: input, shape index: {}]
  %s1 = inlined_call_operand.hbm [shape: f32[128,512], index: 1, kind: input, shape index: {}]
  %s2 = inlined_call_operand.vmem [shape: f32[1,512], index: 2, kind: input, shape index: {}]
  %s3 = inlined_call_operand.hbm [shape: f32[72,512], index: 3, kind: output, shape index: {}]
  %s4 = sld [smem:[#allocation0]]
  $region30: #{tpu_custom_call.1} parent=0
    _
  %s6 = ssub.s32 1, %s4
  %s7 = scalar_select 0, %s6, %s4
  $region1: #{tpu_custom_call.1} parent=0
    #allocation2 [shape = 'u8[36864]{0}', space=vmem, size = 0x9000, scoped, tag = 'input window, operand 0, single buffered']
    #allocation3 [shape = 's32[1]{0}', space=sflag, size = 0x4, scoped, tag = 'scoped memory for tpu_custom_call.1']
    #allocation4 [shape = 's32[1]{0}', space=sflag, size = 0x4, scoped, tag = 'scoped memory for tpu_custom_call.1']
    #allocation5 [shape = 'u8[262144]{0}', space=vmem, size = 0x40000, scoped, tag = 'input window, operand 1, single buffered']
    #allocation6 [shape = 's32[1]{0}', space=sflag, size = 0x4, scoped, tag = 'scoped memory for tpu_custom_call.1']
    #allocation7 [shape = 'u8[147456]{0}', space=vmem, size = 0x24000, scoped, tag = 'output window, operand 0, single buffered']
    %8 = vsyncpa [#allocation3], 0
    %9 = vsyncpa [#allocation6], 0
    %10 = vsyncpa [#allocation4], 0
    // Predicated region
    $region2: #{tpu_custom_call.1} parent=1 // pred_check
      _
    $region3: #{tpu_custom_call.1} parent=1 // pred_check_branch
      %12 = sbr.rel (0) target = $region5
    $region4: #{tpu_custom_call.1} parent=1 // pred_region
      %s14 = ssub.s32 1152, 1152
      %15 = vsyncadd [#allocation3], %s14
      %s16 = sshll.u32 [#allocation2], 4
      %s17 = int_to_ptr.vmem [resolvable:$true] %s16
      %22 = dma.hbm_to_vmem [thread:$0]  %s0, 1152, %s17, [#allocation3], 128, 128, 8
    $region5: #{tpu_custom_call.1} parent=1 // pred_fallthru
      _
    // Predicated region
    $region6: #{tpu_custom_call.1} parent=1 // pred_check
      _
    $region7: #{tpu_custom_call.1} parent=1 // pred_check_branch
      %24 = sbr.rel (0) target = $region9
    $region8: #{tpu_custom_call.1} parent=1 // pred_region
      %s26 = ssub.s32 8192, 8192
      %27 = vsyncadd [#allocation6], %s26
      %s28 = sshll.u32 [#allocation5], 4
      %s29 = int_to_ptr.vmem [resolvable:$true] %s28
      %34 = dma.hbm_to_vmem [thread:$0]  %s1, 8192, %s29, [#allocation6], 512, 512, 32
    $region9: #{tpu_custom_call.1} parent=1 // pred_fallthru
      _
    // Predicated region
    $region10: #{tpu_custom_call.1} parent=1 // pred_check
      _
    $region11: #{tpu_custom_call.1} parent=1 // pred_check_branch
      %36 = sbr.rel (0) target = $region13
    $region12: #{tpu_custom_call.1} parent=1 // pred_region
      _
    $region13: #{tpu_custom_call.1} parent=1 // pred_fallthru
      _
    // Predicated region
    $region14: #{tpu_custom_call.1} parent=1 // pred_check
      _
    $region15: #{tpu_custom_call.1} parent=1 // pred_check_branch
      %38 = sbr.rel (0) target = $region17
    $region16: #{tpu_custom_call.1} parent=1 // pred_region
      %39 = dma.done [#allocation3], 1152
    $region17: #{tpu_custom_call.1} parent=1 // pred_fallthru
      _
    // Predicated region
    $region18: #{tpu_custom_call.1} parent=1 // pred_check
      _
    $region19: #{tpu_custom_call.1} parent=1 // pred_check_branch
      %41 = sbr.rel (0) target = $region21
    $region20: #{tpu_custom_call.1} parent=1 // pred_region
      %42 = dma.done [#allocation6], 8192
    $region21: #{tpu_custom_call.1} parent=1 // pred_fallthru
      _
    %v43 = vld [vmem:[#allocation2] sm:$0xff]
    %v44 = vld [vmem:[#allocation2 + $0x8] sm:$0xff]
    %v45 = vld [vmem:[#allocation2 + $0x10] sm:$0xff]
    %v46 = vld [vmem:[#allocation2 + $0x18] sm:$0xff]
    %v47 = vld [vmem:[#allocation2 + $0x20] sm:$0xff]
    %v48 = vld [vmem:[#allocation2 + $0x28] sm:$0xff]
    %v49 = vld [vmem:[#allocation2 + $0x30] sm:$0xff]
    %v50 = vld [vmem:[#allocation2 + $0x38] sm:$0xff]
    %v51 = vld [vmem:[#allocation2 + $0x40] sm:$0xff]
    %v52 = vld [vmem:[#allocation5] sm:$0xff]
    %v53 = vld [vmem:[#allocation5 + $0x8] sm:$0xff]
    %v54 = vld [vmem:[#allocation5 + $0x10] sm:$0xff]
    %v55 = vld [vmem:[#allocation5 + $0x18] sm:$0xff]
    %v56 = vld [vmem:[#allocation5 + $0x20] sm:$0xff]
    %v57 = vld [vmem:[#allocation5 + $0x28] sm:$0xff]
    %v58 = vld [vmem:[#allocation5 + $0x30] sm:$0xff]
    %v59 = vld [vmem:[#allocation5 + $0x38] sm:$0xff]
    %v60 = vld [vmem:[#allocation5 + $0x40] sm:$0xff]
    %v61 = vld [vmem:[#allocation5 + $0x48] sm:$0xff]
    %v62 = vld [vmem:[#allocation5 + $0x50] sm:$0xff]
    %v63 = vld [vmem:[#allocation5 + $0x58] sm:$0xff]
    %v64 = vld [vmem:[#allocation5 + $0x60] sm:$0xff]
    %v65 = vld [vmem:[#allocation5 + $0x68] sm:$0xff]
    %v66 = vld [vmem:[#allocation5 + $0x70] sm:$0xff]
    %v67 = vld [vmem:[#allocation5 + $0x78] sm:$0xff]
    %v68 = vld [vmem:[#allocation5 + $0x80] sm:$0xff]
    %v69 = vld [vmem:[#allocation5 + $0x88] sm:$0xff]
    %v70 = vld [vmem:[#allocation5 + $0x90] sm:$0xff]
    %v71 = vld [vmem:[#allocation5 + $0x98] sm:$0xff]
    %v72 = vld [vmem:[#allocation5 + $0xa0] sm:$0xff]
    %v73 = vld [vmem:[#allocation5 + $0xa8] sm:$0xff]
    %v74 = vld [vmem:[#allocation5 + $0xb0] sm:$0xff]
    %v75 = vld [vmem:[#allocation5 + $0xb8] sm:$0xff]
    %v76 = vld [vmem:[#allocation5 + $0xc0] sm:$0xff]
    %v77 = vld [vmem:[#allocation5 + $0xc8] sm:$0xff]
    %v78 = vld [vmem:[#allocation5 + $0xd0] sm:$0xff]
    %v79 = vld [vmem:[#allocation5 + $0xd8] sm:$0xff]
    %v80 = vld [vmem:[#allocation5 + $0xe0] sm:$0xff]
    %v81 = vld [vmem:[#allocation5 + $0xe8] sm:$0xff]
    %v82 = vld [vmem:[#allocation5 + $0xf0] sm:$0xff]
    %v83 = vld [vmem:[#allocation5 + $0xf8] sm:$0xff]
    %v84 = vld [vmem:[#allocation5 + $0x100] sm:$0xff]
    %v85 = vld [vmem:[#allocation5 + $0x108] sm:$0xff]
    %v86 = vld [vmem:[#allocation5 + $0x110] sm:$0xff]
    %v87 = vld [vmem:[#allocation5 + $0x118] sm:$0xff]
    %v88 = vld [vmem:[#allocation5 + $0x120] sm:$0xff]
    %v89 = vld [vmem:[#allocation5 + $0x128] sm:$0xff]
    %v90 = vld [vmem:[#allocation5 + $0x130] sm:$0xff]
    %v91 = vld [vmem:[#allocation5 + $0x138] sm:$0xff]
    %v92 = vld [vmem:[#allocation5 + $0x140] sm:$0xff]
    %v93 = vld [vmem:[#allocation5 + $0x148] sm:$0xff]
    %v94 = vld [vmem:[#allocation5 + $0x150] sm:$0xff]
    %v95 = vld [vmem:[#allocation5 + $0x158] sm:$0xff]
    %v96 = vld [vmem:[#allocation5 + $0x160] sm:$0xff]
    %v97 = vld [vmem:[#allocation5 + $0x168] sm:$0xff]
    %v98 = vld [vmem:[#allocation5 + $0x170] sm:$0xff]
    %v99 = vld [vmem:[#allocation5 + $0x178] sm:$0xff]
    %v100 = vld [vmem:[#allocation5 + $0x180] sm:$0xff]
    %v101 = vld [vmem:[#allocation5 + $0x188] sm:$0xff]
    %v102 = vld [vmem:[#allocation5 + $0x190] sm:$0xff]
    %v103 = vld [vmem:[#allocation5 + $0x198] sm:$0xff]
    %v104 = vld [vmem:[#allocation5 + $0x1a0] sm:$0xff]
    %v105 = vld [vmem:[#allocation5 + $0x1a8] sm:$0xff]
    %v106 = vld [vmem:[#allocation5 + $0x1b0] sm:$0xff]
    %v107 = vld [vmem:[#allocation5 + $0x1b8] sm:$0xff]
    %v108 = vld [vmem:[#allocation5 + $0x1c0] sm:$0xff]
    %v109 = vld [vmem:[#allocation5 + $0x1c8] sm:$0xff]
    %v110 = vld [vmem:[#allocation5 + $0x1d0] sm:$0xff]
    %v111 = vld [vmem:[#allocation5 + $0x1d8] sm:$0xff]
    %v112 = vld [vmem:[#allocation5 + $0x1e0] sm:$0xff]
    %v113 = vld [vmem:[#allocation5 + $0x1e8] sm:$0xff]
    %v114 = vld [vmem:[#allocation5 + $0x1f0] sm:$0xff]
    %v115 = vld [vmem:[#allocation5 + $0x1f8] sm:$0xff]
    %v116 = vld [vmem:[%s2] sm:$0xf]
    %v118 = vlaneseq
    %v119 = vshrl.u32 %v118, 7
    %v120 = vsub.s32 0, %v119
    %v121 = vrot.slane %v116, %v120
    %v122 = vlaneseq
    %v123 = vshrl.u32 %v122, 7
    %v124 = vsub.s32 1, %v123
    %v125 = vrot.slane %v116, %v124
    %v126 = vlaneseq
    %v127 = vshrl.u32 %v126, 7
    %v128 = vsub.s32 2, %v127
    %v129 = vrot.slane %v116, %v128
    %v130 = vlaneseq
    %v131 = vshrl.u32 %v130, 7
    %v132 = vsub.s32 3, %v131
    %v133 = vrot.slane %v116, %v132
    %138 = vmatprep.subr.mxu0 %v53
    %139 = vmatpush1.msra.mxu0 %v52
    %140 = vmatprep.subr.mxu0 %v57
    %141 = vmatpush1.msra.mxu0 %v56
    %142 = vmatprep.subr.mxu0 %v61
    %143 = vmatpush1.msra.mxu0 %v60
    %144 = vmatprep.subr.mxu0 %v65
    %145 = vmatpush1.msra.mxu0 %v64
    %146 = vmatprep.subr.mxu0 %v69
    %147 = vmatpush1.msra.mxu0 %v68
    %148 = vmatprep.subr.mxu0 %v73
    %149 = vmatpush1.msra.mxu0 %v72
    %150 = vmatprep.subr.mxu0 %v77
    %151 = vmatpush1.msra.mxu0 %v76
    %152 = vmatprep.subr.mxu0 %v81
    %153 = vmatpush1.msra.mxu0 %v80
    %154 = vmatprep.subr.mxu0 %v85
    %155 = vmatpush1.msra.mxu0 %v84
    %156 = vmatprep.subr.mxu0 %v89
    %157 = vmatpush1.msra.mxu0 %v88
    %158 = vmatprep.subr.mxu0 %v93
    %159 = vmatpush1.msra.mxu0 %v92
    %160 = vmatprep.subr.mxu0 %v97
    %161 = vmatpush1.msra.mxu0 %v96
    %162 = vmatprep.subr.mxu0 %v101
    %163 = vmatpush1.msra.mxu0 %v100
    %164 = vmatprep.subr.mxu0 %v105
    %165 = vmatpush1.msra.mxu0 %v104
    %166 = vmatprep.subr.mxu0 %v109
    %167 = vmatpush1.msra.mxu0 %v108
    %168 = vmatprep.subr.mxu0 %v113
    %169 = vmatpush1.msra.mxu0 %v112
    %170 = vmatprep.subr.mxu0 0.0
    %171 = vmatpush1.msra.mxu0 0.0
    %172 = vmatprep.subr.mxu0 0.0
    %173 = vmatpush1.msra.mxu0 0.0
    %174 = vmatprep.subr.mxu0 0.0
    %175 = vmatpush1.msra.mxu0 0.0
    %176 = vmatprep.subr.mxu0 0.0
    %177 = vmatpush1.msra.mxu0 0.0
    %178 = vmatprep.subr.mxu0 0.0
    %179 = vmatpush1.msra.mxu0 0.0
    %180 = vmatprep.subr.mxu0 0.0
    %181 = vmatpush1.msra.mxu0 0.0
    %182 = vmatprep.subr.mxu0 0.0
    %183 = vmatpush1.msra.mxu0 0.0
    %184 = vmatprep.subr.mxu0 0.0
    %185 = vmatpush1.msra.mxu0 0.0
    %186 = vmatprep.subr.mxu0 0.0
    %187 = vmatpush1.msra.mxu0 0.0
    %188 = vmatprep.subr.mxu0 0.0
    %189 = vmatpush1.msra.mxu0 0.0
    %190 = vmatprep.subr.mxu0 0.0
    %191 = vmatpush1.msra.mxu0 0.0
    %192 = vmatprep.subr.mxu0 0.0
    %193 = vmatpush1.msra.mxu0 0.0
    %194 = vmatprep.subr.mxu0 0.0
    %195 = vmatpush1.msra.mxu0 0.0
    %196 = vmatprep.subr.mxu0 0.0
    %197 = vmatpush1.msra.mxu0 0.0
    %198 = vmatprep.subr.mxu0 0.0
    %199 = vmatpush1.msra.mxu0 0.0
    %200 = vmatprep.subr.mxu0 0.0
    %201 = vmatpush1.msra.mxu0 0.0
    %202 = vmatprep.mubr.f32.mxu0 0.0
    %203 = vmatmul.mubr.f32.gmra.mrb[0].mxu0 %v43
    %v204 = vpop.f32.mrb[0].mxu0
    %v205 = vadd.f32 %v121, %v204
    %v206 = vpop.f32.mrb[0].mxu0
    %v207 = vadd.f32 %v125, %v206
    %208 = vmatprep.mubr.f32.mxu0 0.0
    %209 = vmatmul.mubr.f32.gmra.mrb[0].mxu0 %v44
    %v210 = vpop.f32.mrb[0].mxu0
    %v211 = vadd.f32 %v121, %v210
    %v212 = vpop.f32.mrb[0].mxu0
    %v213 = vadd.f32 %v125, %v212
    %214 = vmatprep.mubr.f32.mxu0 0.0
    %215 = vmatmul.mubr.f32.gmra.mrb[0].mxu0 %v45
    %v216 = vpop.f32.mrb[0].mxu0
    %v217 = vadd.f32 %v121, %v216
    %v218 = vpop.f32.mrb[0].mxu0
    %v219 = vadd.f32 %v125, %v218
    %220 = vmatprep.mubr.f32.mxu0 0.0
    %221 = vmatmul.mubr.f32.gmra.mrb[0].mxu0 %v46
    %v222 = vpop.f32.mrb[0].mxu0
    %v223 = vadd.f32 %v121, %v222
    %v224 = vpop.f32.mrb[0].mxu0
    %v225 = vadd.f32 %v125, %v224
    %226 = vmatprep.mubr.f32.mxu0 0.0
    %227 = vmatmul.mubr.f32.gmra.mrb[0].mxu0 %v47
    %v228 = vpop.f32.mrb[0].mxu0
    %v229 = vadd.f32 %v121, %v228
    %v230 = vpop.f32.mrb[0].mxu0
    %v231 = vadd.f32 %v125, %v230
    %232 = vmatprep.mubr.f32.mxu0 0.0
    %233 = vmatmul.mubr.f32.gmra.mrb[0].mxu0 %v48
    %v234 = vpop.f32.mrb[0].mxu0
    %v235 = vadd.f32 %v121, %v234
    %v236 = vpop.f32.mrb[0].mxu0
    %v237 = vadd.f32 %v125, %v236
    %238 = vmatprep.mubr.f32.mxu0 0.0
    %239 = vmatmul.mubr.f32.gmra.mrb[0].mxu0 %v49
    %v240 = vpop.f32.mrb[0].mxu0
    %v241 = vadd.f32 %v121, %v240
    %v242 = vpop.f32.mrb[0].mxu0
    %v243 = vadd.f32 %v125, %v242
    %244 = vmatprep.mubr.f32.mxu0 0.0
    %245 = vmatmul.mubr.f32.gmra.mrb[0].mxu0 %v50
    %v246 = vpop.f32.mrb[0].mxu0
    %v247 = vadd.f32 %v121, %v246
    %v248 = vpop.f32.mrb[0].mxu0
    %v249 = vadd.f32 %v125, %v248
    %250 = vmatprep.mubr.f32.mxu0 0.0
    %251 = vmatmul.mubr.f32.gmra.mrb[0].mxu0 %v51
    %v252 = vpop.f32.mrb[0].mxu0
    %v253 = vadd.f32 %v121, %v252
    %v254 = vpop.f32.mrb[0].mxu0
    %v255 = vadd.f32 %v125, %v254
    %256 = vdwg.mxu0
    %257 = vmatprep.subr.mxu0 %v55
    %258 = vmatpush1.msra.mxu0 %v54
    %259 = vmatprep.subr.mxu0 %v59
    %260 = vmatpush1.msra.mxu0 %v58
    %261 = vmatprep.subr.mxu0 %v63
    %262 = vmatpush1.msra.mxu0 %v62
    %263 = vmatprep.subr.mxu0 %v67
    %264 = vmatpush1.msra.mxu0 %v66
    %265 = vmatprep.subr.mxu0 %v71
    %266 = vmatpush1.msra.mxu0 %v70
    %267 = vmatprep.subr.mxu0 %v75
    %268 = vmatpush1.msra.mxu0 %v74
    %269 = vmatprep.subr.mxu0 %v79
    %270 = vmatpush1.msra.mxu0 %v78
    %271 = vmatprep.subr.mxu0 %v83
    %272 = vmatpush1.msra.mxu0 %v82
    %273 = vmatprep.subr.mxu0 %v87
    %274 = vmatpush1.msra.mxu0 %v86
    %275 = vmatprep.subr.mxu0 %v91
    %276 = vmatpush1.msra.mxu0 %v90
    %277 = vmatprep.subr.mxu0 %v95
    %278 = vmatpush1.msra.mxu0 %v94
    %279 = vmatprep.subr.mxu0 %v99
    %280 = vmatpush1.msra.mxu0 %v98
    %281 = vmatprep.subr.mxu0 %v103
    %282 = vmatpush1.msra.mxu0 %v102
    %283 = vmatprep.subr.mxu0 %v107
    %284 = vmatpush1.msra.mxu0 %v106
    %285 = vmatprep.subr.mxu0 %v111
    %286 = vmatpush1.msra.mxu0 %v110
    %287 = vmatprep.subr.mxu0 %v115
    %288 = vmatpush1.msra.mxu0 %v114
    %289 = vmatprep.subr.mxu0 0.0
    %290 = vmatpush1.msra.mxu0 0.0
    %291 = vmatprep.subr.mxu0 0.0
    %292 = vmatpush1.msra.mxu0 0.0
    %293 = vmatprep.subr.mxu0 0.0
    %294 = vmatpush1.msra.mxu0 0.0
    %295 = vmatprep.subr.mxu0 0.0
    %296 = vmatpush1.msra.mxu0 0.0
    %297 = vmatprep.subr.mxu0 0.0
    %298 = vmatpush1.msra.mxu0 0.0
    %299 = vmatprep.subr.mxu0 0.0
    %300 = vmatpush1.msra.mxu0 0.0
    %301 = vmatprep.subr.mxu0 0.0
    %302 = vmatpush1.msra.mxu0 0.0
    %303 = vmatprep.subr.mxu0 0.0
    %304 = vmatpush1.msra.mxu0 0.0
    %305 = vmatprep.subr.mxu0 0.0
    %306 = vmatpush1.msra.mxu0 0.0
    %307 = vmatprep.subr.mxu0 0.0
    %308 = vmatpush1.msra.mxu0 0.0
    %309 = vmatprep.subr.mxu0 0.0
    %310 = vmatpush1.msra.mxu0 0.0
    %311 = vmatprep.subr.mxu0 0.0
    %312 = vmatpush1.msra.mxu0 0.0
    %313 = vmatprep.subr.mxu0 0.0
    %314 = vmatpush1.msra.mxu0 0.0
    %315 = vmatprep.subr.mxu0 0.0
    %316 = vmatpush1.msra.mxu0 0.0
    %317 = vmatprep.subr.mxu0 0.0
    %318 = vmatpush1.msra.mxu0 0.0
    %319 = vmatprep.subr.mxu0 0.0
    %320 = vmatpush1.msra.mxu0 0.0
    %321 = vmatprep.mubr.f32.mxu0 0.0
    %322 = vmatmul.mubr.f32.gmra.mrb[0].mxu0 %v43
    %v323 = vpop.f32.mrb[0].mxu0
    %v324 = vadd.f32 %v129, %v323
    %v325 = vpop.f32.mrb[0].mxu0
    %v326 = vadd.f32 %v133, %v325
    %327 = vmatprep.mubr.f32.mxu0 0.0
    %328 = vmatmul.mubr.f32.gmra.mrb[0].mxu0 %v44
    %v329 = vpop.f32.mrb[0].mxu0
    %v330 = vadd.f32 %v129, %v329
    %v331 = vpop.f32.mrb[0].mxu0
    %v332 = vadd.f32 %v133, %v331
    %333 = vmatprep.mubr.f32.mxu0 0.0
    %334 = vmatmul.mubr.f32.gmra.mrb[0].mxu0 %v45
    %v335 = vpop.f32.mrb[0].mxu0
    %v336 = vadd.f32 %v129, %v335
    %v337 = vpop.f32.mrb[0].mxu0
    %v338 = vadd.f32 %v133, %v337
    %339 = vmatprep.mubr.f32.mxu0 0.0
    %340 = vmatmul.mubr.f32.gmra.mrb[0].mxu0 %v46
    %v341 = vpop.f32.mrb[0].mxu0
    %v342 = vadd.f32 %v129, %v341
    %v343 = vpop.f32.mrb[0].mxu0
    %v344 = vadd.f32 %v133, %v343
    %345 = vmatprep.mubr.f32.mxu0 0.0
    %346 = vmatmul.mubr.f32.gmra.mrb[0].mxu0 %v47
    %v347 = vpop.f32.mrb[0].mxu0
    %v348 = vadd.f32 %v129, %v347
    %v349 = vpop.f32.mrb[0].mxu0
    %v350 = vadd.f32 %v133, %v349
    %351 = vmatprep.mubr.f32.mxu0 0.0
    %352 = vmatmul.mubr.f32.gmra.mrb[0].mxu0 %v48
    %v353 = vpop.f32.mrb[0].mxu0
    %v354 = vadd.f32 %v129, %v353
    %v355 = vpop.f32.mrb[0].mxu0
    %v356 = vadd.f32 %v133, %v355
    %357 = vmatprep.mubr.f32.mxu0 0.0
    %358 = vmatmul.mubr.f32.gmra.mrb[0].mxu0 %v49
    %v359 = vpop.f32.mrb[0].mxu0
    %v360 = vadd.f32 %v129, %v359
    %v361 = vpop.f32.mrb[0].mxu0
    %v362 = vadd.f32 %v133, %v361
    %363 = vmatprep.mubr.f32.mxu0 0.0
    %364 = vmatmul.mubr.f32.gmra.mrb[0].mxu0 %v50
    %v365 = vpop.f32.mrb[0].mxu0
    %v366 = vadd.f32 %v129, %v365
    %v367 = vpop.f32.mrb[0].mxu0
    %v368 = vadd.f32 %v133, %v367
    %369 = vmatprep.mubr.f32.mxu0 0.0
    %370 = vmatmul.mubr.f32.gmra.mrb[0].mxu0 %v51
    %v371 = vpop.f32.mrb[0].mxu0
    %v372 = vadd.f32 %v129, %v371
    %v373 = vpop.f32.mrb[0].mxu0
    %v374 = vadd.f32 %v133, %v373
    %375 = vdwg.mxu0
    %376 = vst [vmem:[#allocation7] sm:$0xff] %v205
    %377 = vst [vmem:[#allocation7 + $0x8] sm:$0xff] %v207
    %378 = vst [vmem:[#allocation7 + $0x10] sm:$0xff] %v324
    %379 = vst [vmem:[#allocation7 + $0x18] sm:$0xff] %v326
    %380 = vst [vmem:[#allocation7 + $0x20] sm:$0xff] %v211
    %381 = vst [vmem:[#allocation7 + $0x28] sm:$0xff] %v213
    %382 = vst [vmem:[#allocation7 + $0x30] sm:$0xff] %v330
    %383 = vst [vmem:[#allocation7 + $0x38] sm:$0xff] %v332
    %384 = vst [vmem:[#allocation7 + $0x40] sm:$0xff] %v217
    %385 = vst [vmem:[#allocation7 + $0x48] sm:$0xff] %v219
    %386 = vst [vmem:[#allocation7 + $0x50] sm:$0xff] %v336
    %387 = vst [vmem:[#allocation7 + $0x58] sm:$0xff] %v338
    %388 = vst [vmem:[#allocation7 + $0x60] sm:$0xff] %v223
    %389 = vst [vmem:[#allocation7 + $0x68] sm:$0xff] %v225
    %390 = vst [vmem:[#allocation7 + $0x70] sm:$0xff] %v342
    %391 = vst [vmem:[#allocation7 + $0x78] sm:$0xff] %v344
    %392 = vst [vmem:[#allocation7 + $0x80] sm:$0xff] %v229
    %393 = vst [vmem:[#allocation7 + $0x88] sm:$0xff] %v231
    %394 = vst [vmem:[#allocation7 + $0x90] sm:$0xff] %v348
    %395 = vst [vmem:[#allocation7 + $0x98] sm:$0xff] %v350
    %396 = vst [vmem:[#allocation7 + $0xa0] sm:$0xff] %v235
    %397 = vst [vmem:[#allocation7 + $0xa8] sm:$0xff] %v237
    %398 = vst [vmem:[#allocation7 + $0xb0] sm:$0xff] %v354
    %399 = vst [vmem:[#allocation7 + $0xb8] sm:$0xff] %v356
    %400 = vst [vmem:[#allocation7 + $0xc0] sm:$0xff] %v241
    %401 = vst [vmem:[#allocation7 + $0xc8] sm:$0xff] %v243
    %402 = vst [vmem:[#allocation7 + $0xd0] sm:$0xff] %v360
    %403 = vst [vmem:[#allocation7 + $0xd8] sm:$0xff] %v362
    %404 = vst [vmem:[#allocation7 + $0xe0] sm:$0xff] %v247
    %405 = vst [vmem:[#allocation7 + $0xe8] sm:$0xff] %v249
    %406 = vst [vmem:[#allocation7 + $0xf0] sm:$0xff] %v366
    %407 = vst [vmem:[#allocation7 + $0xf8] sm:$0xff] %v368
    %408 = vst [vmem:[#allocation7 + $0x100] sm:$0xff] %v253
    %409 = vst [vmem:[#allocation7 + $0x108] sm:$0xff] %v255
    %410 = vst [vmem:[#allocation7 + $0x110] sm:$0xff] %v372
    %411 = vst [vmem:[#allocation7 + $0x118] sm:$0xff] %v374
    // Predicated region
    $region22: #{tpu_custom_call.1} parent=1 // pred_check
      _
    $region23: #{tpu_custom_call.1} parent=1 // pred_check_branch
      %413 = sbr.rel (0) target = $region25
    $region24: #{tpu_custom_call.1} parent=1 // pred_region
      %s415 = ssub.s32 4608, 4608
      %416 = vsyncadd [#allocation4], %s415
      %s417 = sshll.u32 [#allocation7], 4
      %s418 = int_to_ptr.vmem [resolvable:$true] %s417
      %423 = dma.vmem_to_hbm [thread:$0]  %s418, 4608, %s3, [#allocation4], 512, 512, 32
    $region25: #{tpu_custom_call.1} parent=1 // pred_fallthru
      _
    // Predicated region
    $region26: #{tpu_custom_call.1} parent=1 // pred_check
      _
    $region27: #{tpu_custom_call.1} parent=1 // pred_check_branch
      %425 = sbr.rel (0) target = $region29
    $region28: #{tpu_custom_call.1} parent=1 // pred_region
      %426 = dma.done [#allocation4], 4608
    $region29: #{tpu_custom_call.1} parent=1 // pred_fallthru
      _
    %427 = vsyncpa [#allocation3], 1
    %428 = vsyncpa [#allocation6], 1
    %429 = vsyncpa [#allocation4], 1

</llo_original>
